<compile_context>
chip_gen: v5e
topology: v5e:2x2
jax: 0.10.0
libtpu: 0.0.40
codegen_flags: <defaults>
</compile_context>

<pallas_src>
import jax
import jax.numpy as jnp
from jax.experimental import pallas as pl
from jax.experimental.pallas import tpu as pltpu

_LANE = 128
# ~2 MiB tiles: (in + out) x double-buffer = ~8 MiB of scoped VMEM, safely
# under v5e's 16 MiB default and v6e/v7x's 32 MiB default, while sitting on
# the ~85-86% HBM-roofline plateau measured for wide tiles.
_TARGET_TILE_BYTES = 2 * 1024 * 1024
_MAX_COLS = 16384  # cap on the lane-dense trailing dimension


def _identity_kernel(x_ref, o_ref):
    # Elementwise copy of the current VMEM tile.
    o_ref[...] = x_ref[...]


def _copy_2d(x2d: jax.Array, block_rows: int) -> jax.Array:
    rows, cols = x2d.shape
    grid = (pl.cdiv(rows, block_rows),)
    return pl.pallas_call(
        _identity_kernel,
        out_shape=jax.ShapeDtypeStruct((rows, cols), x2d.dtype),
        grid=grid,
        in_specs=[pl.BlockSpec((block_rows, cols), lambda i: (i, 0))],
        out_specs=pl.BlockSpec((block_rows, cols), lambda i: (i, 0)),
        # Output reuses the input buffer when XLA can donate it (free inside a
        # larger jit); otherwise XLA inserts a copy and semantics are unchanged.
        input_output_aliases={0: 0},
        compiler_params=pltpu.CompilerParams(
            # 1-D parallel grid: lets v7x shard row-blocks across its 2 TCs.
            dimension_semantics=("parallel",),
        ),
    )(x2d)


def identity(x: jax.Array) -> jax.Array:
    """Pallas identity: out = x (same shape, same dtype)."""
    orig_shape = x.shape
    dtype = x.dtype
    n = x.size
    if n == 0:
        return x

    itemsize = jnp.dtype(dtype).itemsize
    # Packed-native sublane count: 8 (f32), 16 (bf16), 32 (int8/fp8).
    sub = max(8, 32 // itemsize)

    if n % _LANE == 0:
        # Lane-dense layout: trailing dim is the largest power-of-two multiple
        # of 128 dividing n (capped), so loads/stores are wide, unmasked slabs.
        m = n // _LANE
        c = 1
        while m % (c * 2) == 0 and (c * 2) * _LANE <= _MAX_COLS:
            c *= 2
        cols = c * _LANE
        rows = n // cols

        # Multi-MiB row blocks (multiple of the packed sublane count) amortize
        # the ~0.35 us per-grid-step overhead away.
        br = _TARGET_TILE_BYTES // (cols * itemsize)
        br = max(sub, (br // sub) * sub)
        if br >= rows:
            br = rows  # single block == full array dims (exempt from (8,128))
        out2d = _copy_2d(x.reshape(rows, cols), br)
        return out2d.reshape(orig_shape)

    # Ragged fallback: one full-array block (block_shape == array dims is
    # exempt from the (8,128) rule). No padding / concatenate copies.
    # TODO(synk): for very large inputs whose size is not a multiple of 128,
    # split into a tiled main slab + small tail instead of one VMEM block.
    out2d = _copy_2d(x.reshape(1, n), 1)
    return out2d.reshape(orig_shape)


if __name__ == "__main__":
    key = jax.random.PRNGKey(0)

    # Small NCHW input consistent with the module's forward.
    x = jax.random.normal(key, (2, 4, 16, 16), dtype=jnp.float32)
    y = identity(x)
    jax.block_until_ready(y)
    assert y.shape == x.shape, (y.shape, x.shape)
    assert y.dtype == x.dtype, (y.dtype, x.dtype)
    assert bool(jnp.all(y == x)), "identity kernel output mismatch (aligned path)"

    # Ragged-size path (size not a multiple of 128).
    x2 = jax.random.normal(jax.random.PRNGKey(0), (3, 5, 7), dtype=jnp.float32)
    y2 = identity(x2)
    jax.block_until_ready(y2)
    assert y2.shape == x2.shape and y2.dtype == x2.dtype
    assert bool(jnp.all(y2 == x2)), "identity kernel output mismatch (ragged path)"

    print("KERNEL_OK")
</pallas_src>

<mosaic_0001>
module attributes {stable_mosaic.version = 11 : i64} {
  func.func @_identity_kernel(%arg0: i32, %arg1: memref<1x2048xf32, #tpu.memory_space<vmem>>, %arg2: memref<1x2048xf32, #tpu.memory_space<vmem>>) attributes {dimension_semantics = [#tpu.dimension_semantics<parallel>], iteration_bounds = array<i64: 1>, scalar_prefetch = 0 : i64, scratch_operands = 0 : i64, tpu.core_type = #tpu.core_type<tc>, window_params = [{transform_indices = @transform_0, window_bounds = array<i64: 1, 2048>}, {transform_indices = @transform_1, window_bounds = array<i64: 1, 2048>}]} {
    %c0 = arith.constant 0 : index
    %c0_0 = arith.constant 0 : index
    %0 = vector.load %arg1[%c0, %c0_0] : memref<1x2048xf32, #tpu.memory_space<vmem>>, vector<1x2048xf32>
    %c0_1 = arith.constant 0 : index
    %c0_2 = arith.constant 0 : index
    %1 = vector.load %arg2[%c0_1, %c0_2] : memref<1x2048xf32, #tpu.memory_space<vmem>>, vector<1x2048xf32>
    tpu.vector_store %arg2[%c0_1, %c0_2], %0 {strides = array<i32>} : memref<1x2048xf32, #tpu.memory_space<vmem>>, vector<1x2048xf32>,
    return
  }
  func.func @transform_0(%arg0: i32) -> (i32, i32) {
    %c0_i32 = arith.constant 0 : i32
    %c0_i32_0 = arith.constant 0 : i32
    return %arg0, %c0_i32 : i32, i32
  }
  func.func @transform_1(%arg0: i32) -> (i32, i32) {
    %c0_i32 = arith.constant 0 : i32
    %c0_i32_0 = arith.constant 0 : i32
    return %arg0, %c0_i32 : i32, i32
  }
}

</mosaic_0001>

<llo_original>
// kernel: tpu_custom_call.1
$region0: #{tpu_custom_call.1}
  #allocation0 [shape = 'u32[]', space=smem, size = 0x4, offset = 0x4, fixed_abs, tag = 'smem constant byte address 0x4 - core index']
  #allocation1 [shape = 'u32[72,128]{1,0:T(1,128)}', space=vmem, size = 0x9000, scoped, tag = 'internal scratch']
  %s0 = inlined_call_operand.hbm [shape: f32[1,2048], index: 0, kind: input, shape index: {}, may-alias: {0,1}]
  %s1 = inlined_call_operand.hbm [shape: f32[1,2048], index: 1, kind: output, shape index: {}, may-alias: {0,1}]
  %s2 = sld [smem:[#allocation0]]
  $region18: #{tpu_custom_call.1} parent=0
    _
  %s4 = ssub.s32 1, %s2
  %s5 = scalar_select 0, %s4, %s2
  $region1: #{tpu_custom_call.1} parent=0
    #allocation2 [shape = 'u8[8192]{0}', space=vmem, size = 0x2000, scoped, tag = 'input window, operand 0, single buffered']
    #allocation3 [shape = 's32[1]{0}', space=sflag, size = 0x4, scoped, tag = 'scoped memory for tpu_custom_call.1']
    #allocation4 [shape = 's32[1]{0}', space=sflag, size = 0x4, scoped, tag = 'scoped memory for tpu_custom_call.1']
    #allocation5 [shape = 'u8[8192]{0}', space=vmem, size = 0x2000, scoped, tag = 'output window, operand 0, single buffered']
    %6 = vsyncpa [#allocation3], 0
    %7 = vsyncpa [#allocation4], 0
    // Predicated region
    $region2: #{tpu_custom_call.1} parent=1 // pred_check
      _
    $region3: #{tpu_custom_call.1} parent=1 // pred_check_branch
      %9 = sbr.rel (0) target = $region5
    $region4: #{tpu_custom_call.1} parent=1 // pred_region
      %11 = vsyncadd [#allocation3], 0
      %s13 = sshll.u32 %s0, 4
      %s14 = int_to_ptr.hbm [resolvable:$true] %s13
      %s15 = sshll.u32 [#allocation2], 4
      %s16 = int_to_ptr.vmem [resolvable:$true] %s15
      %18 = dma.hbm_to_vmem [thread:$0]  %s14, 256, %s16, [#allocation3]
    $region5: #{tpu_custom_call.1} parent=1 // pred_fallthru
      _
    // Predicated region
    $region6: #{tpu_custom_call.1} parent=1 // pred_check
      _
    $region7: #{tpu_custom_call.1} parent=1 // pred_check_branch
      %20 = sbr.rel (0) target = $region9
    $region8: #{tpu_custom_call.1} parent=1 // pred_region
      %22 = dma.done [#allocation3], 256
    $region9: #{tpu_custom_call.1} parent=1 // pred_fallthru
      _
    %v23 = vld [vmem:[#allocation2] sm:$0xff]
    %v24 = vld [vmem:[#allocation2 + $0x8] sm:$0xff]
    %25 = vst [vmem:[#allocation5] sm:$0xff] %v23
    %26 = vst [vmem:[#allocation5 + $0x8] sm:$0xff] %v24
    // Predicated region
    $region10: #{tpu_custom_call.1} parent=1 // pred_check
      _
    $region11: #{tpu_custom_call.1} parent=1 // pred_check_branch
      %28 = sbr.rel (0) target = $region13
    $region12: #{tpu_custom_call.1} parent=1 // pred_region
      %30 = vsyncadd [#allocation4], 0
      %s32 = sshll.u32 [#allocation5], 4
      %s33 = int_to_ptr.vmem [resolvable:$true] %s32
      %s34 = sshll.u32 %s1, 4
      %s35 = int_to_ptr.hbm [resolvable:$true] %s34
      %37 = dma.vmem_to_hbm [thread:$0]  %s33, 256, %s35, [#allocation4]
    $region13: #{tpu_custom_call.1} parent=1 // pred_fallthru
      _
    // Predicated region
    $region14: #{tpu_custom_call.1} parent=1 // pred_check
      _
    $region15: #{tpu_custom_call.1} parent=1 // pred_check_branch
      %39 = sbr.rel (0) target = $region17
    $region16: #{tpu_custom_call.1} parent=1 // pred_region
      %41 = dma.done [#allocation4], 256
    $region17: #{tpu_custom_call.1} parent=1 // pred_fallthru
      _
    %42 = vsyncpa [#allocation3], 1
    %43 = vsyncpa [#allocation4], 1

</llo_original>
